<compile_context>
chip_gen: v5e
topology: v5e:2x2
jax: 0.10.0
libtpu: 0.0.40
codegen_flags: <defaults>
</compile_context>

<pallas_src>
import functools

import jax
import jax.numpy as jnp
import numpy as np
from jax.experimental import pallas as pl
from jax.experimental.pallas import tpu as pltpu


_LANES = 128
_SUBLANES = 8
_TARGET_BLOCK_BYTES = 6 * 1024 * 1024   # per-step logits+targets budget
_VMEM_LIMIT_BYTES = 32 * 1024 * 1024


# ----------------------------------------------------------------------------
# helpers
# ----------------------------------------------------------------------------
def _round_up(x, m):
    return -(-x // m) * m


def _pow(p, gamma):
    """p ** gamma for a static Python gamma (integer gammas -> VALU multiplies)."""
    g = float(gamma)
    if g == 0.0:
        return jnp.ones_like(p)
    if g.is_integer() and 1.0 <= g <= 8.0:
        out = p
        for _ in range(int(g) - 1):
            out = out * p
        return out
    return jnp.power(p, g)


def _fold_rows(a):
    """(rows, 128) -> (8, 128): sum groups of 8 sublane rows (layout-preserving)."""
    rows = a.shape[0]
    if rows == _SUBLANES:
        return a
    return jnp.sum(a.reshape(rows // _SUBLANES, _SUBLANES, a.shape[1]), axis=0)


def _pick_tile_rows(num_rows, num_classes, logits_itemsize,
                    target_block_bytes=_TARGET_BLOCK_BYTES):
    """Largest multiple-of-8 row count whose logits+target block fits the budget."""
    bytes_per_row = (num_classes * logits_itemsize + 4) * _LANES
    max_rows = max(_SUBLANES,
                   (target_block_bytes // bytes_per_row) // _SUBLANES * _SUBLANES)
    return int(min(_round_up(num_rows, _SUBLANES), max_rows))


# ----------------------------------------------------------------------------
# Pallas kernel: per-(batch, pixel-tile) CE (+ optional focal modulation),
# folded into an (8,128) partial-sum block per grid cell.
# ----------------------------------------------------------------------------
def _dynamic_loss_kernel(logits_ref, tgt_ref, loss_ref, valid_ref, *,
                         ignore_index, gamma, num_classes):
    x = logits_ref[...].astype(jnp.float32)        # (C, T, 128), upcast in-kernel
    tgt = tgt_ref[...]                             # (T, 128) int32

    # log-sum-exp over the leading class axis (plain VPU max/add on full vregs)
    m = jnp.max(x, axis=0)                         # (T, 128)
    e = jnp.exp(x - m)                             # (C, T, 128)
    s = jnp.sum(e, axis=0)                         # (T, 128)
    lse = jnp.log(s) + m                           # (T, 128)

    cls = jax.lax.broadcasted_iota(jnp.int32, x.shape, 0)   # (C, T, 128)
    onehot = cls == tgt                                      # (C, T, 128)
    valid = tgt != ignore_index                              # (T, 128)

    # fused gather: x_t = x[target];  NLL_px = lse - x_t
    x_t = jnp.sum(jnp.where(onehot, x, 0.0), axis=0)         # (T, 128)
    per_px = jnp.where(valid, lse - x_t, 0.0)                # (T, 128)

    if gamma != 0:
        # focal factor: softmax probs via reused e and ONE (T,128) reciprocal;
        # ignored pixels have per_px == 0, so their (finite) factor is irrelevant.
        inv_s = pl.reciprocal(s)                             # (T, 128)
        fg_p = jnp.sum(jnp.where(onehot, e, 0.0), axis=0) * inv_s
        bg_tgt = jnp.minimum(jnp.maximum(1 - tgt, 0), num_classes - 1)
        bg_p = jnp.sum(jnp.where(cls == bg_tgt, e, 0.0), axis=0) * inv_s
        per_px = per_px * (_pow(fg_p, gamma) + _pow(bg_p, gamma))

    # lane/sublane-wise partial sums; one tiny cross-lane reduce in the wrapper
    loss_ref[...] = _fold_rows(per_px)
    valid_ref[...] = _fold_rows(valid.astype(jnp.float32))


def _dynamic_loss_pallas(inputs, targets_scaled, *, gamma, ignore_index):
    """inputs: (B,C,H,W) f32/bf16; targets_scaled: (B,H,W) int."""
    B, C, H, W = inputs.shape
    HW = H * W
    itemsize = jnp.dtype(inputs.dtype).itemsize

    num_rows = -(-HW // _LANES)                      # ceil(HW / 128)
    tile = _pick_tile_rows(num_rows, C, itemsize)
    rows_pad = _round_up(num_rows, tile)
    hw_pad = rows_pad * _LANES
    nt = rows_pad // tile

    logits = inputs.reshape(B, C, HW)                # native dtype, no f32 cast
    tgt = targets_scaled.reshape(B, HW).astype(jnp.int32)
    if hw_pad != HW:                                 # pad: logits 0, targets ignored
        logits = jnp.pad(logits, ((0, 0), (0, 0), (0, hw_pad - HW)))
        tgt = jnp.pad(tgt, ((0, 0), (0, hw_pad - HW)), constant_values=ignore_index)
    logits = logits.reshape(B, C, rows_pad, _LANES)
    tgt = tgt.reshape(B, rows_pad, _LANES)

    kernel = functools.partial(_dynamic_loss_kernel, ignore_index=ignore_index,
                               gamma=gamma, num_classes=C)
    loss_part, valid_part = pl.pallas_call(
        kernel,
        out_shape=(jax.ShapeDtypeStruct((B, nt, _SUBLANES, _LANES), jnp.float32),
                   jax.ShapeDtypeStruct((B, nt, _SUBLANES, _LANES), jnp.float32)),
        grid=(B, nt),
        in_specs=[
            pl.BlockSpec((None, C, tile, _LANES), lambda b, t: (b, 0, t, 0)),
            pl.BlockSpec((None, tile, _LANES), lambda b, t: (b, t, 0)),
        ],
        out_specs=(
            pl.BlockSpec((None, None, _SUBLANES, _LANES), lambda b, t: (b, t, 0, 0)),
            pl.BlockSpec((None, None, _SUBLANES, _LANES), lambda b, t: (b, t, 0, 0)),
        ),
        compiler_params=pltpu.CompilerParams(
            dimension_semantics=("parallel", "parallel"),
            vmem_limit_bytes=_VMEM_LIMIT_BYTES,
        ),
    )(logits, tgt)

    loss_sum = jnp.sum(loss_part)
    num_valid = jnp.sum(valid_part.astype(jnp.int32))   # exact integer count
    # total_loss.sum() / (targets != ignore_index).sum()
    return loss_sum / num_valid


# ----------------------------------------------------------------------------
# Glue (plain JAX): nearest-neighbor target scaling (F.interpolate 'nearest').
# ----------------------------------------------------------------------------
def _scale_target(targets, scaled_size):
    # targets: (B, 1, Hin, Win); nearest interpolate, squeeze(1), cast to int.
    B, _, Hin, Win = targets.shape
    Hout, Wout = scaled_size
    hi = jnp.floor(jnp.arange(Hout) * (Hin / Hout)).astype(jnp.int32)
    wi = jnp.floor(jnp.arange(Wout) * (Win / Wout)).astype(jnp.int32)
    t = targets[:, 0][:, hi, :][:, :, wi]
    return t.astype(jnp.int32)                 # (B, Hout, Wout)


def dynamic_loss_forward(inputs, targets, *, gamma=0, ignore_index=-255):
    """Forward of DynamicLoss. The registered `weight` buffer is unused by the
    module's criterion_ce, so it is intentionally not applied here."""
    H, W = inputs.shape[2], inputs.shape[3]
    tgt_scaled = _scale_target(targets, (H, W))
    return _dynamic_loss_pallas(inputs, tgt_scaled,
                                gamma=gamma, ignore_index=ignore_index)


# ----------------------------------------------------------------------------
# Pure-JAX reference (self-check of the kernel math).
# ----------------------------------------------------------------------------
def _reference(inputs_f32, tgt_scaled, ignore_index, gamma):
    C = inputs_f32.shape[1]
    logp = jax.nn.log_softmax(inputs_f32, axis=1)
    valid = tgt_scaled != ignore_index
    t_safe = jnp.where(valid, tgt_scaled, 0)
    nll = -jnp.take_along_axis(logp, t_safe[:, None], axis=1)[:, 0]
    per = jnp.where(valid, nll, 0.0)
    if gamma != 0:
        prob = jax.nn.softmax(inputs_f32, axis=1)
        fg_idx = t_safe[:, None]
        bg_idx = jnp.clip(jnp.maximum(1 - tgt_scaled, 0), 0, C - 1)[:, None]
        fg_p = jnp.take_along_axis(prob, fg_idx, axis=1)[:, 0]
        bg_p = jnp.take_along_axis(prob, bg_idx, axis=1)[:, 0]
        per = per * (fg_p ** gamma + bg_p ** gamma)
    return per.sum() / valid.sum()


if __name__ == "__main__":
    ignore_index = -255
    key = jax.random.PRNGKey(0)

    configs = [
        # small shape from the module spec (f32), target at a different resolution
        dict(B=2, C=4, H=16, W=16, TH=32, TW=32, dtype=jnp.float32),
        # bf16 stream + multi-row-group tile + odd class count
        dict(B=2, C=5, H=64, W=64, TH=64, TW=64, dtype=jnp.bfloat16),
    ]

    for cfg in configs:
        key, k1, k2, k3 = jax.random.split(key, 4)
        inputs = jax.random.normal(
            k1, (cfg["B"], cfg["C"], cfg["H"], cfg["W"]),
            dtype=jnp.float32).astype(cfg["dtype"])
        tgt_small = jax.random.randint(
            k2, (cfg["B"], 1, cfg["TH"], cfg["TW"]), 0, cfg["C"])
        ignore_mask = jax.random.uniform(
            k3, (cfg["B"], 1, cfg["TH"], cfg["TW"])) < 0.2
        targets = jnp.where(ignore_mask, ignore_index, tgt_small).astype(jnp.float32)

        tgt_scaled = _scale_target(targets, (cfg["H"], cfg["W"]))
        for gamma in (0, 2):
            loss = dynamic_loss_forward(inputs, targets,
                                        gamma=gamma, ignore_index=ignore_index)
            loss = jax.block_until_ready(loss)

            ref = _reference(inputs.astype(jnp.float32), tgt_scaled,
                             ignore_index, gamma)
            np.testing.assert_allclose(np.asarray(loss), np.asarray(ref),
                                       rtol=1e-5, atol=1e-5)

    print("KERNEL_OK")
</pallas_src>

<mosaic_0001>
module attributes {stable_mosaic.version = 11 : i64} {
  func.func @_dynamic_loss_kernel(%arg0: i32, %arg1: i32, %arg2: memref<1x4x8x128xf32, #tpu.memory_space<vmem>>, %arg3: memref<1x8x128xi32, #tpu.memory_space<vmem>>, %arg4: memref<1x1x8x128xf32, #tpu.memory_space<vmem>>, %arg5: memref<1x1x8x128xf32, #tpu.memory_space<vmem>>) attributes {dimension_semantics = [#tpu.dimension_semantics<parallel>, #tpu.dimension_semantics<parallel>], iteration_bounds = array<i64: 2, 1>, scalar_prefetch = 0 : i64, scratch_operands = 0 : i64, tpu.core_type = #tpu.core_type<tc>, window_params = [{transform_indices = @transform_0, window_bounds = array<i64: 1, 4, 8, 128>}, {transform_indices = @transform_1, window_bounds = array<i64: 1, 8, 128>}, {transform_indices = @transform_2, window_bounds = array<i64: 1, 1, 8, 128>}, {transform_indices = @transform_3, window_bounds = array<i64: 1, 1, 8, 128>}]} {
    %c0 = arith.constant 0 : index
    %c0_0 = arith.constant 0 : index
    %c0_1 = arith.constant 0 : index
    %c0_2 = arith.constant 0 : index
    %0 = vector.load %arg2[%c0, %c0_0, %c0_1, %c0_2] : memref<1x4x8x128xf32, #tpu.memory_space<vmem>>, vector<1x4x8x128xf32>
    %1 = vector.shape_cast %0 : vector<1x4x8x128xf32> to vector<4x8x128xf32>
    %c0_3 = arith.constant 0 : index
    %c0_4 = arith.constant 0 : index
    %c0_5 = arith.constant 0 : index
    %2 = vector.load %arg3[%c0_3, %c0_4, %c0_5] : memref<1x8x128xi32, #tpu.memory_space<vmem>>, vector<1x8x128xi32>
    %3 = vector.shape_cast %2 : vector<1x8x128xi32> to vector<8x128xi32>
    %cst = arith.constant dense<0xFF800000> : vector<8x128xf32>
    %4 = vector.multi_reduction <maximumf>, %1, %cst [0] : vector<4x8x128xf32> to vector<8x128xf32>
    %5 = vector.shape_cast %4 : vector<8x128xf32> to vector<1x8x128xf32>
    %6 = vector.broadcast %5 : vector<1x8x128xf32> to vector<4x8x128xf32>
    %7 = arith.subf %1, %6 : vector<4x8x128xf32>
    %8 = math.exp %7 : vector<4x8x128xf32>
    %cst_6 = arith.constant dense<0.000000e+00> : vector<8x128xf32>
    %9 = vector.multi_reduction <add>, %8, %cst_6 [0] : vector<4x8x128xf32> to vector<8x128xf32>
    %10 = math.log %9 : vector<8x128xf32>
    %11 = arith.addf %10, %4 : vector<8x128xf32>
    %12 = tpu.iota {dimensions = array<i32: 0>} : vector<4x8x128xi32>
    %13 = vector.shape_cast %3 : vector<8x128xi32> to vector<1x8x128xi32>
    %14 = vector.broadcast %13 : vector<1x8x128xi32> to vector<4x8x128xi32>
    %15 = arith.cmpi eq, %12, %14 : vector<4x8x128xi32>
    %c-255_i32 = arith.constant -255 : i32
    %16 = vector.broadcast %c-255_i32 : i32 to vector<8x128xi32>
    %17 = arith.cmpi ne, %3, %16 : vector<8x128xi32>
    %cst_7 = arith.constant 0.000000e+00 : f32
    %18 = vector.broadcast %cst_7 : f32 to vector<4x8x128xf32>
    %19 = arith.select %15, %1, %18 : vector<4x8x128xi1>, vector<4x8x128xf32>
    %cst_8 = arith.constant dense<0.000000e+00> : vector<8x128xf32>
    %20 = vector.multi_reduction <add>, %19, %cst_8 [0] : vector<4x8x128xf32> to vector<8x128xf32>
    %21 = arith.subf %11, %20 : vector<8x128xf32>
    %cst_9 = arith.constant 0.000000e+00 : f32
    %22 = vector.broadcast %cst_9 : f32 to vector<8x128xf32>
    %23 = arith.select %17, %21, %22 : vector<8x128xi1>, vector<8x128xf32>
    %c0_10 = arith.constant 0 : index
    %c0_11 = arith.constant 0 : index
    %c0_12 = arith.constant 0 : index
    %c0_13 = arith.constant 0 : index
    %24 = vector.load %arg4[%c0_10, %c0_11, %c0_12, %c0_13] : memref<1x1x8x128xf32, #tpu.memory_space<vmem>>, vector<1x1x8x128xf32>
    %25 = vector.shape_cast %24 : vector<1x1x8x128xf32> to vector<8x128xf32>
    %26 = vector.shape_cast %23 : vector<8x128xf32> to vector<1x1x8x128xf32>
    tpu.vector_store %arg4[%c0_10, %c0_11, %c0_12, %c0_13], %26 {strides = array<i32>} : memref<1x1x8x128xf32, #tpu.memory_space<vmem>>, vector<1x1x8x128xf32>,
    %27 = arith.extui %17 : vector<8x128xi1> to vector<8x128xi32>
    %28 = arith.sitofp %27 : vector<8x128xi32> to vector<8x128xf32>
    %c0_14 = arith.constant 0 : index
    %c0_15 = arith.constant 0 : index
    %c0_16 = arith.constant 0 : index
    %c0_17 = arith.constant 0 : index
    %29 = vector.load %arg5[%c0_14, %c0_15, %c0_16, %c0_17] : memref<1x1x8x128xf32, #tpu.memory_space<vmem>>, vector<1x1x8x128xf32>
    %30 = vector.shape_cast %29 : vector<1x1x8x128xf32> to vector<8x128xf32>
    %31 = vector.shape_cast %28 : vector<8x128xf32> to vector<1x1x8x128xf32>
    tpu.vector_store %arg5[%c0_14, %c0_15, %c0_16, %c0_17], %31 {strides = array<i32>} : memref<1x1x8x128xf32, #tpu.memory_space<vmem>>, vector<1x1x8x128xf32>,
    return
  }
  func.func @transform_0(%arg0: i32, %arg1: i32) -> (i32, i32, i32, i32) {
    %c0_i32 = arith.constant 0 : i32
    %c0_i32_0 = arith.constant 0 : i32
    %c0_i32_1 = arith.constant 0 : i32
    return %arg0, %c0_i32, %arg1, %c0_i32_0 : i32, i32, i32, i32
  }
  func.func @transform_1(%arg0: i32, %arg1: i32) -> (i32, i32, i32) {
    %c0_i32 = arith.constant 0 : i32
    %c0_i32_0 = arith.constant 0 : i32
    return %arg0, %arg1, %c0_i32 : i32, i32, i32
  }
  func.func @transform_2(%arg0: i32, %arg1: i32) -> (i32, i32, i32, i32) {
    %c0_i32 = arith.constant 0 : i32
    %c0_i32_0 = arith.constant 0 : i32
    %c0_i32_1 = arith.constant 0 : i32
    return %arg0, %arg1, %c0_i32, %c0_i32_0 : i32, i32, i32, i32
  }
  func.func @transform_3(%arg0: i32, %arg1: i32) -> (i32, i32, i32, i32) {
    %c0_i32 = arith.constant 0 : i32
    %c0_i32_0 = arith.constant 0 : i32
    %c0_i32_1 = arith.constant 0 : i32
    return %arg0, %arg1, %c0_i32, %c0_i32_0 : i32, i32, i32, i32
  }
}

</mosaic_0001>

<llo_original>
// kernel: tpu_custom_call.1
$region0: #{tpu_custom_call.1}
  #allocation0 [shape = 'u32[]', space=smem, size = 0x4, offset = 0x4, fixed_abs, tag = 'smem constant byte address 0x4 - core index']
  #allocation1 [shape = 'u32[72,128]{1,0:T(1,128)}', space=vmem, size = 0x9000, scoped, tag = 'internal scratch']
  %s0 = inlined_call_operand.hbm [shape: f32[2,4,8,128], index: 0, kind: input, shape index: {}]
  %s1 = inlined_call_operand.hbm [shape: s32[2,8,128], index: 1, kind: input, shape index: {}]
  %s2 = inlined_call_operand.hbm [shape: f32[2,1,8,128], index: 2, kind: output, shape index: {0}]
  %s3 = inlined_call_operand.hbm [shape: f32[2,1,8,128], index: 3, kind: output, shape index: {1}]
  %4 = xla_tuple %s2, %s3
  %s5 = sld [smem:[#allocation0]]
  $region57: #{tpu_custom_call.1} parent=0
    _
  %s7 = ssub.s32 1, %s5
  %s8 = scalar_select 0, %s7, %s5
  $region1: #{tpu_custom_call.1} parent=0
    #allocation2 [shape = 'u8[32768]{0}', space=vmem, size = 0x8000, scoped, tag = 'input window, operand 0']
    #allocation3 [shape = 's32[2]{0}', space=sflag, size = 0x8, scoped, tag = 'scoped memory for tpu_custom_call.1']
    #allocation4 [shape = 's32[2]{0}', space=sflag, size = 0x8, scoped, tag = 'scoped memory for tpu_custom_call.1']
    #allocation5 [shape = 'u8[8192]{0}', space=vmem, size = 0x2000, scoped, tag = 'input window, operand 1']
    #allocation6 [shape = 's32[2]{0}', space=sflag, size = 0x8, scoped, tag = 'scoped memory for tpu_custom_call.1']
    #allocation7 [shape = 'u8[8192]{0}', space=vmem, size = 0x2000, scoped, tag = 'output window, operand 0']
    #allocation8 [shape = 'u8[8192]{0}', space=vmem, size = 0x2000, scoped, tag = 'output window, operand 1']
    #allocation9 [shape = 's32[2]{0}', space=sflag, size = 0x8, scoped, tag = 'scoped memory for tpu_custom_call.1']
    %9 = vsyncpa [#allocation3], 0
    %s10 = scalar_lea.sflag [#allocation3], 1
    %11 = vsyncpa %s10, 0
    %12 = vsyncpa [#allocation6], 0
    %s13 = scalar_lea.sflag [#allocation6], 1
    %14 = vsyncpa %s13, 0
    %15 = vsyncpa [#allocation4], 0
    %s16 = scalar_lea.sflag [#allocation4], 1
    %17 = vsyncpa %s16, 0
    %18 = vsyncpa [#allocation9], 0
    %s19 = scalar_lea.sflag [#allocation9], 1
    %20 = vsyncpa %s19, 0
    loop: start=0, step=1, limit=4
    $region2: #{tpu_custom_call.1} parent=1 // loop_pre_header
      _
    $region3: #{tpu_custom_call.1} parent=1 // loop_header
      %s22 = sphi 0, %s26
      %p23 = scmp.ge.s32.totalorder %s22, 4
      %s29 = sphi 0, %s41
      %s30 = sphi 0, %s37
      %s31 = sphi 0, %s29
      %s32 = sphi 0, %s30
      %s33 = sphi 0, %s31
      %s34 = sphi 0, %s32
      %s46 = sphi 0, %s48
      %s49 = sphi 0, %s46
      %s50 = sphi 0, %s49
      %s66 = sphi 0, %s50
      %s74 = sphi 0, %s76
      %s77 = sphi 0, %s74
      %s78 = sphi 0, %s77
      %s94 = sphi 0, %s78
      %s102 = sphi 0, %s104
      %s105 = sphi 0, %s102
      %s106 = sphi 0, %s105
      %s122 = sphi 0, %s106
      %s130 = sphi 0, %s132
      %s133 = sphi 0, %s130
      %s134 = sphi 0, %s133
      %s150 = sphi 0, %s134
    $region4: #{tpu_custom_call.1} parent=1 // loop_header_branch
      %25 = sbr.rel (%p23) target = $region8
    $region5: #{tpu_custom_call.1} parent=1 // loop_body
      %s27 = ssub.s32 %s22, 1
      %s28 = ssub.s32 %s22, 2
      %s35 = sadd.s32 1, %s30
      %p36 = scmp.ge.s32.totalorder %s35, 1
      %s37 = scalar_select %p36, 0, %s35
      %s38 = sadd.s32 1, %s29
      %s39 = scalar_select %p36, %s38, %s29
      %p40 = scmp.ge.s32.totalorder %s39, 2
      %s41 = scalar_select %p40, 0, %s39
      %s42 = ssub.s32 %s29, %s41
      %s43 = ssub.s32 %s30, %s37
      %s44 = sor.u32 %s42, %s43
      %p45 = scmp.eq.s32.totalorder %s44, 0
      %s47 = sadd.s32 %s46, 1
      %s48 = scalar_select %p45, %s46, %s47
      %p51 = pneg %p45
      %p52 = scmp.eq.s32.totalorder %s22, 1
      %p53 = por %p51, %p52
      %p54 = scmp.ne.s32.totalorder %s46, %s49
      %p55 = scmp.eq.s32.totalorder %s22, 0
      %p56 = por %p54, %p55
      %p57 = scmp.ne.s32.totalorder %s46, %s49
      %p58 = scmp.eq.s32.totalorder %s27, 1
      %p59 = por %p57, %p58
      %p60 = scmp.ne.s32.totalorder %s49, %s50
      %p61 = scmp.eq.s32.totalorder %s27, 0
      %p62 = por %p60, %p61
      %p63 = scmp.ne.s32.totalorder %s49, %s50
      %p64 = scmp.eq.s32.totalorder %s28, 1
      %p65 = por %p63, %p64
      %p67 = scmp.ne.s32.totalorder %s50, %s66
      %p68 = scmp.eq.s32.totalorder %s28, 0
      %p69 = por %p67, %p68
      %s70 = ssub.s32 %s29, %s41
      %s71 = ssub.s32 %s30, %s37
      %s72 = sor.u32 %s70, %s71
      %p73 = scmp.eq.s32.totalorder %s72, 0
      %s75 = sadd.s32 %s74, 1
      %s76 = scalar_select %p73, %s74, %s75
      %p79 = pneg %p73
      %p80 = scmp.eq.s32.totalorder %s22, 1
      %p81 = por %p79, %p80
      %p82 = scmp.ne.s32.totalorder %s74, %s77
      %p83 = scmp.eq.s32.totalorder %s22, 0
      %p84 = por %p82, %p83
      %p85 = scmp.ne.s32.totalorder %s74, %s77
      %p86 = scmp.eq.s32.totalorder %s27, 1
      %p87 = por %p85, %p86
      %p88 = scmp.ne.s32.totalorder %s77, %s78
      %p89 = scmp.eq.s32.totalorder %s27, 0
      %p90 = por %p88, %p89
      %p91 = scmp.ne.s32.totalorder %s77, %s78
      %p92 = scmp.eq.s32.totalorder %s28, 1
      %p93 = por %p91, %p92
      %p95 = scmp.ne.s32.totalorder %s78, %s94
      %p96 = scmp.eq.s32.totalorder %s28, 0
      %p97 = por %p95, %p96
      %s98 = ssub.s32 %s29, %s41
      %s99 = ssub.s32 %s30, %s37
      %s100 = sor.u32 %s98, %s99
      %p101 = scmp.eq.s32.totalorder %s100, 0
      %s103 = sadd.s32 %s102, 1
      %s104 = scalar_select %p101, %s102, %s103
      %p107 = pneg %p101
      %p108 = scmp.eq.s32.totalorder %s22, 1
      %p109 = por %p107, %p108
      %p110 = scmp.ne.s32.totalorder %s102, %s105
      %p111 = scmp.eq.s32.totalorder %s22, 0
      %p112 = por %p110, %p111
      %p113 = scmp.ne.s32.totalorder %s102, %s105
      %p114 = scmp.eq.s32.totalorder %s27, 1
      %p115 = por %p113, %p114
      %p116 = scmp.ne.s32.totalorder %s105, %s106
      %p117 = scmp.eq.s32.totalorder %s27, 0
      %p118 = por %p116, %p117
      %p119 = scmp.ne.s32.totalorder %s105, %s106
      %p120 = scmp.eq.s32.totalorder %s28, 1
      %p121 = por %p119, %p120
      %p123 = scmp.ne.s32.totalorder %s106, %s122
      %p124 = scmp.eq.s32.totalorder %s28, 0
      %p125 = por %p123, %p124
      %s126 = ssub.s32 %s29, %s41
      %s127 = ssub.s32 %s30, %s37
      %s128 = sor.u32 %s126, %s127
      %p129 = scmp.eq.s32.totalorder %s128, 0
      %s131 = sadd.s32 %s130, 1
      %s132 = scalar_select %p129, %s130, %s131
      %p135 = pneg %p129
      %p136 = scmp.eq.s32.totalorder %s22, 1
      %p137 = por %p135, %p136
      %p138 = scmp.ne.s32.totalorder %s130, %s133
      %p139 = scmp.eq.s32.totalorder %s22, 0
      %p140 = por %p138, %p139
      %p141 = scmp.ne.s32.totalorder %s130, %s133
      %p142 = scmp.eq.s32.totalorder %s27, 1
      %p143 = por %p141, %p142
      %p144 = scmp.ne.s32.totalorder %s133, %s134
      %p145 = scmp.eq.s32.totalorder %s27, 0
      %p146 = por %p144, %p145
      %p147 = scmp.ne.s32.totalorder %s133, %s134
      %p148 = scmp.eq.s32.totalorder %s28, 1
      %p149 = por %p147, %p148
      %p151 = scmp.ne.s32.totalorder %s134, %s150
      %p152 = scmp.eq.s32.totalorder %s28, 0
      %p153 = por %p151, %p152
      %p154 = scmp.le.s32.totalorder 1, %s22
      %p155 = scmp.lt.s32.totalorder %s22, 3
      %p156 = pnand %p154, %p155
      %p157 = pneg %p156
      // Predicated region
      $region9: #{tpu_custom_call.1} parent=5 // pred_check
        _
      $region10: #{tpu_custom_call.1} parent=5 // pred_check_branch
        %159 = sbr.rel (%p156) target = $region12
      $region11: #{tpu_custom_call.1} parent=5 // pred_region
        %s160 = ssub.s32 %s22, 1
      $region12: #{tpu_custom_call.1} parent=5 // pred_fallthru
        _
      %p161 = scmp.lt.s32.totalorder %s22, 2
      // Predicated region
      $region13: #{tpu_custom_call.1} parent=5 // pred_check
        %p162 = pneg %p161
      $region14: #{tpu_custom_call.1} parent=5 // pred_check_branch
        %164 = sbr.rel (%p162) target = $region16
      $region15: #{tpu_custom_call.1} parent=5 // pred_region
        // Predicated region
        $region17: #{tpu_custom_call.1} parent=15 // pred_check
          %p165 = pneg %p56
        $region18: #{tpu_custom_call.1} parent=15 // pred_check_branch
          %167 = sbr.rel (%p165) target = $region20
        $region19: #{tpu_custom_call.1} parent=15 // pred_region
          %s168 = sand.u32 %s46, 1
          %s169 = scalar_lea.sflag [#allocation3], %s168
          %s170 = sand.u32 %s46, 1
          %s171 = smul.addr %s170, 32
          %s172 = scalar_lea.vmem [#allocation2], %s171
          %174 = vsyncadd %s169, 0
          %s175 = smul.addr %s29, 4
          %s176 = sadd.s32 %s30, %s175
          %s177 = smul.addr %s176, 8
          %s178 = scalar_lea.hbm %s0, %s177
          %s179 = sshll.u32 %s178, 4
          %s180 = int_to_ptr.hbm [resolvable:$true] %s179
          %s181 = sshll.u32 %s172, 4
          %s182 = int_to_ptr.vmem [resolvable:$true] %s181
          %187 = dma.hbm_to_vmem [thread:$0]  %s180, 512, %s182, %s169, 128, 128, 8
        $region20: #{tpu_custom_call.1} parent=15 // pred_fallthru
          _
        // Predicated region
        $region21: #{tpu_custom_call.1} parent=15 // pred_check
          %p188 = pneg %p84
        $region22: #{tpu_custom_call.1} parent=15 // pred_check_branch
          %190 = sbr.rel (%p188) target = $region24
        $region23: #{tpu_custom_call.1} parent=15 // pred_region
          %s191 = sand.u32 %s74, 1
          %s192 = scalar_lea.sflag [#allocation6], %s191
          %s193 = sand.u32 %s74, 1
          %s194 = smul.addr %s193, 8
          %s195 = scalar_lea.vmem [#allocation5], %s194
          %197 = vsyncadd %s192, 0
          %s198 = sadd.s32 %s30, %s29
          %s199 = smul.addr %s198, 8
          %s200 = scalar_lea.hbm %s1, %s199
          %s202 = sshll.u32 %s200, 4
          %s203 = int_to_ptr.hbm [resolvable:$true] %s202
          %s204 = sshll.u32 %s195, 4
          %s205 = int_to_ptr.vmem [resolvable:$true] %s204
          %207 = dma.hbm_to_vmem [thread:$0]  %s203, 128, %s205, %s192
        $region24: #{tpu_custom_call.1} parent=15 // pred_fallthru
          _
      $region16: #{tpu_custom_call.1} parent=5 // pred_fallthru
        _
      %p208 = scmp.le.s32.totalorder 1, %s22
      %p209 = scmp.lt.s32.totalorder %s22, 3
      %p210 = pnand %p208, %p209
      %p211 = pneg %p210
      // Predicated region
      $region25: #{tpu_custom_call.1} parent=5 // pred_check
        _
      $region26: #{tpu_custom_call.1} parent=5 // pred_check_branch
        %213 = sbr.rel (%p210) target = $region28
      $region27: #{tpu_custom_call.1} parent=5 // pred_region
        %s214 = ssub.s32 %s22, 1
        %s215 = sand.u32 %s49, 1
        %s216 = scalar_lea.sflag [#allocation3], %s215
        %s217 = sand.u32 %s49, 1
        %s218 = smul.addr %s217, 32
        %s219 = scalar_lea.vmem [#allocation2], %s218
        // Predicated region
        $region29: #{tpu_custom_call.1} parent=27 // pred_check
          %p220 = pneg %p62
        $region30: #{tpu_custom_call.1} parent=27 // pred_check_branch
          %222 = sbr.rel (%p220) target = $region32
        $region31: #{tpu_custom_call.1} parent=27 // pred_region
          %224 = dma.done %s216, 512
        $region32: #{tpu_custom_call.1} parent=27 // pred_fallthru
          _
        %s225 = sand.u32 %s77, 1
        %s226 = scalar_lea.sflag [#allocation6], %s225
        %s227 = sand.u32 %s77, 1
        %s228 = smul.addr %s227, 8
        %s229 = scalar_lea.vmem [#allocation5], %s228
        // Predicated region
        $region33: #{tpu_custom_call.1} parent=27 // pred_check
          %p230 = pneg %p90
        $region34: #{tpu_custom_call.1} parent=27 // pred_check_branch
          %232 = sbr.rel (%p230) target = $region36
        $region35: #{tpu_custom_call.1} parent=27 // pred_region
          %234 = dma.done %s226, 128
        $region36: #{tpu_custom_call.1} parent=27 // pred_fallthru
          _
        %s235 = sand.u32 %s49, 1
        %s236 = scalar_lea.sflag [#allocation3], %s235
        %s237 = sand.u32 %s49, 1
        %s238 = smul.addr %s237, 32
        %s239 = scalar_lea.vmem [#allocation2], %s238
        %p240 = pneg %p62
        %p241 = pneg %p59
        %s242 = sand.u32 %s77, 1
        %s243 = scalar_lea.sflag [#allocation6], %s242
        %s244 = sand.u32 %s77, 1
        %s245 = smul.addr %s244, 8
        %s246 = scalar_lea.vmem [#allocation5], %s245
        %p247 = pneg %p90
        %p248 = pneg %p87
        %p249 = pneg %p118
        %p250 = pneg %p115
        %s251 = sand.u32 %s105, 1
        %s252 = scalar_lea.sflag [#allocation4], %s251
        %s253 = sand.u32 %s105, 1
        %s254 = smul.addr %s253, 8
        %s255 = scalar_lea.vmem [#allocation7], %s254
        %p256 = pneg %p146
        %p257 = pneg %p143
        %s258 = sand.u32 %s133, 1
        %s259 = scalar_lea.sflag [#allocation9], %s258
        %s260 = sand.u32 %s133, 1
        %s261 = smul.addr %s260, 8
        %s262 = scalar_lea.vmem [#allocation8], %s261
        %v263 = vld [vmem:[%s219] sm:$0xff]
        %v264 = vld [vmem:[%s219 + $0x8] sm:$0xff]
        %v265 = vld [vmem:[%s219 + $0x10] sm:$0xff]
        %v266 = vld [vmem:[%s219 + $0x18] sm:$0xff]
        %v267 = vld [vmem:[%s229] sm:$0xff]
        %v268 = vmax.f32 %v263, %v264
        %v269 = vmax.f32 %v265, %v266
        %v270 = vmax.f32 %v268, %v269
        %v271 = vsub.f32 %v263, %v270
        %v272 = vsub.f32 %v264, %v270
        %v273 = vsub.f32 %v265, %v270
        %v274 = vsub.f32 %v266, %v270
        %v275 = vmul.f32 %v271, 1.442695
        %v276 = vpow.pop %v275
        %v277 = vmul.f32 %v272, 1.442695
        %v278 = vpow.pop %v277
        %v279 = vmul.f32 %v273, 1.442695
        %v280 = vpow.pop %v279
        %v281 = vmul.f32 %v274, 1.442695
        %v282 = vpow.pop %v281
        %v283 = vadd.f32 %v276, %v278
        %v284 = vadd.f32 %v283, %v280
        %v285 = vadd.f32 %v284, %v282
        %v286 = vlog2.pop %v285
        %v287 = vmul.f32 %v286, 0.6931472
        %v288 = vadd.f32 %v287, %v270
        %vm289 = vcmp.eq.s32.totalorder %v267, 0
        %vm290 = vcmp.eq.s32.totalorder %v267, 1
        %vm291 = vcmp.eq.s32.totalorder %v267, 2
        %vm292 = vcmp.eq.s32.totalorder %v267, 3
        %vm293 = vcmp.ne.s32.totalorder %v267, 4294967041
        %v294 = vsel %vm289, %v263, 0.0
        %v295 = vsel %vm290, %v264, 0.0
        %v296 = vsel %vm291, %v265, 0.0
        %v297 = vsel %vm292, %v266, 0.0
        %v298 = vadd.f32 %v294, %v295
        %v299 = vadd.f32 %v298, %v296
        %v300 = vadd.f32 %v299, %v297
        %v301 = vsub.f32 %v288, %v300
        %v302 = vsel %vm293, %v301, 0.0
        %303 = vst [vmem:[%s255] sm:$0xff] %v302
        %v304 = vsel %vm293, 1, 0
        %v305 = vcvt.s32.f32 %v304
        %306 = vst [vmem:[%s262] sm:$0xff] %v305
        %s307 = sand.u32 %s105, 1
        %s308 = scalar_lea.sflag [#allocation4], %s307
        %s309 = sand.u32 %s105, 1
        %s310 = smul.addr %s309, 8
        %s311 = scalar_lea.vmem [#allocation7], %s310
        %s312 = sand.u32 %s133, 1
        %s313 = scalar_lea.sflag [#allocation9], %s312
        %s314 = sand.u32 %s133, 1
        %s315 = smul.addr %s314, 8
        %s316 = scalar_lea.vmem [#allocation8], %s315
        // Predicated region
        $region37: #{tpu_custom_call.1} parent=27 // pred_check
          %p317 = pneg %p115
        $region38: #{tpu_custom_call.1} parent=27 // pred_check_branch
          %319 = sbr.rel (%p317) target = $region40
        $region39: #{tpu_custom_call.1} parent=27 // pred_region
          %321 = vsyncadd %s308, 0
          %s322 = sadd.s32 %s32, %s31
          %s323 = smul.addr %s322, 8
          %s324 = scalar_lea.hbm %s2, %s323
          %s326 = sshll.u32 %s311, 4
          %s327 = int_to_ptr.vmem [resolvable:$true] %s326
          %s328 = sshll.u32 %s324, 4
          %s329 = int_to_ptr.hbm [resolvable:$true] %s328
          %331 = dma.vmem_to_hbm [thread:$0]  %s327, 128, %s329, %s308
        $region40: #{tpu_custom_call.1} parent=27 // pred_fallthru
          _
        // Predicated region
        $region41: #{tpu_custom_call.1} parent=27 // pred_check
          %p332 = pneg %p143
        $region42: #{tpu_custom_call.1} parent=27 // pred_check_branch
          %334 = sbr.rel (%p332) target = $region44
        $region43: #{tpu_custom_call.1} parent=27 // pred_region
          %336 = vsyncadd %s313, 0
          %s337 = sadd.s32 %s32, %s31
          %s338 = smul.addr %s337, 8
          %s339 = scalar_lea.hbm %s3, %s338
          %s341 = sshll.u32 %s316, 4
          %s342 = int_to_ptr.vmem [resolvable:$true] %s341
          %s343 = sshll.u32 %s339, 4
          %s344 = int_to_ptr.hbm [resolvable:$true] %s343
          %346 = dma.vmem_to_hbm [thread:$0]  %s342, 128, %s344, %s313
        $region44: #{tpu_custom_call.1} parent=27 // pred_fallthru
          _
      $region28: #{tpu_custom_call.1} parent=5 // pred_fallthru
        _
      %p347 = scmp.le.s32.totalorder 2, %s22
      // Predicated region
      $region45: #{tpu_custom_call.1} parent=5 // pred_check
        %p348 = pneg %p347
      $region46: #{tpu_custom_call.1} parent=5 // pred_check_branch
        %350 = sbr.rel (%p348) target = $region48
      $region47: #{tpu_custom_call.1} parent=5 // pred_region
        %s351 = ssub.s32 %s22, 2
        // Predicated region
        $region49: #{tpu_custom_call.1} parent=47 // pred_check
          %p352 = pneg %p121
        $region50: #{tpu_custom_call.1} parent=47 // pred_check_branch
          %354 = sbr.rel (%p352) target = $region52
        $region51: #{tpu_custom_call.1} parent=47 // pred_region
          %s355 = sand.u32 %s106, 1
          %s356 = scalar_lea.sflag [#allocation4], %s355
          %s357 = sand.u32 %s106, 1
          %s358 = smul.addr %s357, 8
          %s359 = scalar_lea.vmem [#allocation7], %s358
          %361 = dma.done %s356, 128
        $region52: #{tpu_custom_call.1} parent=47 // pred_fallthru
          _
        // Predicated region
        $region53: #{tpu_custom_call.1} parent=47 // pred_check
          %p362 = pneg %p149
        $region54: #{tpu_custom_call.1} parent=47 // pred_check_branch
          %364 = sbr.rel (%p362) target = $region56
        $region55: #{tpu_custom_call.1} parent=47 // pred_region
          %s365 = sand.u32 %s134, 1
          %s366 = scalar_lea.sflag [#allocation9], %s365
          %s367 = sand.u32 %s134, 1
          %s368 = smul.addr %s367, 8
          %s369 = scalar_lea.vmem [#allocation8], %s368
          %371 = dma.done %s366, 128
        $region56: #{tpu_custom_call.1} parent=47 // pred_fallthru
          _
      $region48: #{tpu_custom_call.1} parent=5 // pred_fallthru
        _
    $region6: #{tpu_custom_call.1} parent=1 // loop_footer
      %s26 = sadd.s32 1, %s22
    $region7: #{tpu_custom_call.1} parent=1 // loop_footer_branch
      %21 = sbr.rel target = $region3
    $region8: #{tpu_custom_call.1} parent=1 // loop_exit
      _
    %372 = vsyncpa [#allocation3], 1
    %s373 = scalar_lea.sflag [#allocation3], 1
    %374 = vsyncpa %s373, 1
    %375 = vsyncpa [#allocation6], 1
    %s376 = scalar_lea.sflag [#allocation6], 1
    %377 = vsyncpa %s376, 1
    %378 = vsyncpa [#allocation4], 1
    %s379 = scalar_lea.sflag [#allocation4], 1
    %380 = vsyncpa %s379, 1
    %381 = vsyncpa [#allocation9], 1
    %s382 = scalar_lea.sflag [#allocation9], 1
    %383 = vsyncpa %s382, 1

</llo_original>
